<compile_context>
chip_gen: v7x
topology: tpu7x:2x2x1
jax: 0.10.0
libtpu: 0.0.40
codegen_flags: <defaults>
</compile_context>

<pallas_src>
import jax
import jax.numpy as jnp
from jax.experimental import pallas as pl
from jax.experimental.pallas import tpu as pltpu


def _round_up(x: int, m: int) -> int:
    return ((x + m - 1) // m) * m


def _energy_force_kernel(pos_ref, w_ref, energy_ref, force_ref):
    """Fused per-atom energy + force = -dE/dpos for one tile of atoms.

    pos_ref    : (3, TILE_N)  f32   positions, lane-dense over atoms
    w_ref      : (H, 3)       f32   surrogate-energy weights (transposed)
    energy_ref : (1, TILE_N)  f32   per-atom energy
    force_ref  : (3, TILE_N)  f32   force = -dE/dpos, lane-dense over atoms
    """
    pos = pos_ref[...]                      # (3, TN)
    w = w_ref[...]                          # (H, 3)

    px = pos[0:1, :]                        # (1, TN)
    py = pos[1:2, :]
    pz = pos[2:3, :]
    wx = w[:, 0:1]                          # (H, 1)
    wy = w[:, 1:2]
    wz = w[:, 2:3]

    # z[h, n] = sum_d W[d, h] * pos[d, n]  -- 3 broadcast FMAs on the VPU,
    # no MXU for the degenerate K=3 contraction.
    z = wx * px + wy * py + wz * pz         # (H, TN)
    t = jnp.tanh(z)                         # (H, TN)   EUP

    # Per-atom energy: reduce over the hidden axis (sublane reduce, XLU).
    energy_ref[...] = jnp.sum(t, axis=0, keepdims=True)          # (1, TN)

    # Analytic gradient with fused ForceOutput negation:
    #   force[d, n] = -sum_h (1 - t[h, n]^2) * W[d, h]
    g = 1.0 - t * t                         # (H, TN)
    fx = -jnp.sum(g * wx, axis=0, keepdims=True)                  # (1, TN)
    fy = -jnp.sum(g * wy, axis=0, keepdims=True)
    fz = -jnp.sum(g * wz, axis=0, keepdims=True)
    force_ref[...] = jnp.concatenate([fx, fy, fz], axis=0)        # (3, TN)


def energy_and_force(pos: jax.Array, w: jax.Array, *, tile_n: int = 2048):
    """pos: [N, 3] f32, w: [3, H] f32  ->  (energy [N], force [N, 3])."""
    n, three = pos.shape
    assert three == 3, "pos must be [N, 3]"
    h = w.shape[1]

    # Lane-dense: atoms on the 128-wide lane axis; tile is a multiple of 128.
    tile_n = min(tile_n, _round_up(n, 128))
    n_pad = _round_up(n, tile_n)

    pos_t = jnp.transpose(pos).astype(jnp.float32)                # (3, N)
    if n_pad != n:
        pos_t = jnp.pad(pos_t, ((0, 0), (0, n_pad - n)))
    w_t = jnp.transpose(w).astype(jnp.float32)                    # (H, 3)

    grid = (n_pad // tile_n,)
    energy_t, force_t = pl.pallas_call(
        _energy_force_kernel,
        out_shape=(
            jax.ShapeDtypeStruct((1, n_pad), jnp.float32),
            jax.ShapeDtypeStruct((3, n_pad), jnp.float32),
        ),
        grid=grid,
        in_specs=[
            pl.BlockSpec((3, tile_n), lambda i: (0, i)),          # pos^T tile
            pl.BlockSpec((h, 3), lambda i: (0, 0)),               # full tiny W^T
        ],
        out_specs=(
            pl.BlockSpec((1, tile_n), lambda i: (0, i)),          # energy tile
            pl.BlockSpec((3, tile_n), lambda i: (0, i)),          # force^T tile
        ),
        compiler_params=pltpu.CompilerParams(
            dimension_semantics=("parallel",),
        ),
    )(pos_t, w_t)

    energy = energy_t[0, :n]                                       # (N,)
    force = jnp.transpose(force_t[:, :n])                          # (N, 3)
    return energy, force


class ForceOutput:
    """JAX/Pallas port of sevenn.nn.force_output.ForceOutput.

    Computes force = -d(energy.sum())/d(pos); the gradient is taken
    analytically inside the fused Pallas kernel (playing the role of
    torch.autograd.grad) and the negation is fused into the same pass.
    """

    # TODO(synk): the real SevenNet energy comes from the full GNN; a
    # surrogate per-atom energy E_i = sum_h tanh(pos_i @ W) stands in here, so
    # only the (-gradient -> force) plumbing matches the PyTorch module.

    KEY_POS = "pos"
    KEY_ENERGY = "scaled_energy"
    KEY_FORCE = "scaled_force"

    def __init__(self, w: jax.Array, tile_n: int = 2048):
        self.w = w
        self.tile_n = tile_n

    def __call__(self, data: dict) -> dict:
        energy, force = energy_and_force(
            data[self.KEY_POS], self.w, tile_n=self.tile_n
        )
        data[self.KEY_ENERGY] = energy
        data[self.KEY_FORCE] = force
        return data


if __name__ == "__main__":
    key = jax.random.PRNGKey(0)
    k_pos, k_w = jax.random.split(key)

    n_atoms, hidden = 256, 32
    pos = jax.random.normal(k_pos, (n_atoms, 3), dtype=jnp.float32)
    w = 0.5 * jax.random.normal(k_w, (3, hidden), dtype=jnp.float32)

    module = ForceOutput(w, tile_n=128)          # small tile -> 2-step grid
    data = module({"pos": pos})
    energy = jax.block_until_ready(data["scaled_energy"])
    force = jax.block_until_ready(data["scaled_force"])

    # Reference: jax.grad plays the role of torch.autograd.grad.
    energy_fn = lambda p: jnp.sum(jnp.tanh(p @ w))
    force_ref = -jax.grad(energy_fn)(pos)
    energy_ref = jnp.sum(jnp.tanh(pos @ w), axis=-1)

    assert energy.shape == (n_atoms,) and force.shape == (n_atoms, 3)
    assert jnp.allclose(energy, energy_ref, rtol=1e-3, atol=1e-3)
    assert jnp.allclose(force, force_ref, rtol=1e-3, atol=1e-3)

    print("KERNEL_OK")
</pallas_src>

<mosaic_0001>
module attributes {stable_mosaic.version = 11 : i64} {
  func.func @_energy_force_kernel(%arg0: i32, %arg1: memref<3x128xf32, #tpu.memory_space<vmem>>, %arg2: memref<32x3xf32, #tpu.memory_space<vmem>>, %arg3: memref<1x128xf32, #tpu.memory_space<vmem>>, %arg4: memref<3x128xf32, #tpu.memory_space<vmem>>) attributes {dimension_semantics = [#tpu.dimension_semantics<parallel>], iteration_bounds = array<i64: 2>, scalar_prefetch = 0 : i64, scratch_operands = 0 : i64, tpu.core_type = #tpu.core_type<tc>, window_params = [{transform_indices = @transform_0, window_bounds = array<i64: 3, 128>}, {pipeline_mode = #tpu.pipeline_mode<synchronous>, transform_indices = @transform_1, window_bounds = array<i64: 32, 3>}, {transform_indices = @transform_2, window_bounds = array<i64: 1, 128>}, {transform_indices = @transform_3, window_bounds = array<i64: 3, 128>}]} {
    %c0 = arith.constant 0 : index
    %c0_0 = arith.constant 0 : index
    %0 = vector.load %arg1[%c0, %c0_0] : memref<3x128xf32, #tpu.memory_space<vmem>>, vector<3x128xf32>
    %c0_1 = arith.constant 0 : index
    %c0_2 = arith.constant 0 : index
    %1 = vector.load %arg2[%c0_1, %c0_2] : memref<32x3xf32, #tpu.memory_space<vmem>>, vector<32x3xf32>
    %2 = vector.extract_strided_slice %0 {offsets = [0, 0], sizes = [1, 128], strides = [1, 1]} : vector<3x128xf32> to vector<1x128xf32>
    %3 = vector.extract_strided_slice %0 {offsets = [1, 0], sizes = [1, 128], strides = [1, 1]} : vector<3x128xf32> to vector<1x128xf32>
    %4 = vector.extract_strided_slice %0 {offsets = [2, 0], sizes = [1, 128], strides = [1, 1]} : vector<3x128xf32> to vector<1x128xf32>
    %5 = vector.extract_strided_slice %1 {offsets = [0, 0], sizes = [32, 1], strides = [1, 1]} : vector<32x3xf32> to vector<32x1xf32>
    %6 = vector.extract_strided_slice %1 {offsets = [0, 1], sizes = [32, 1], strides = [1, 1]} : vector<32x3xf32> to vector<32x1xf32>
    %7 = vector.extract_strided_slice %1 {offsets = [0, 2], sizes = [32, 1], strides = [1, 1]} : vector<32x3xf32> to vector<32x1xf32>
    %8 = vector.broadcast %5 : vector<32x1xf32> to vector<32x128xf32>
    %9 = vector.broadcast %2 : vector<1x128xf32> to vector<32x128xf32>
    %10 = arith.mulf %8, %9 : vector<32x128xf32>
    %11 = vector.broadcast %6 : vector<32x1xf32> to vector<32x128xf32>
    %12 = vector.broadcast %3 : vector<1x128xf32> to vector<32x128xf32>
    %13 = arith.mulf %11, %12 : vector<32x128xf32>
    %14 = arith.addf %10, %13 : vector<32x128xf32>
    %15 = vector.broadcast %7 : vector<32x1xf32> to vector<32x128xf32>
    %16 = vector.broadcast %4 : vector<1x128xf32> to vector<32x128xf32>
    %17 = arith.mulf %15, %16 : vector<32x128xf32>
    %18 = arith.addf %14, %17 : vector<32x128xf32>
    %19 = math.tanh %18 : vector<32x128xf32>
    %cst = arith.constant dense<0.000000e+00> : vector<128xf32>
    %20 = vector.multi_reduction <add>, %19, %cst [0] : vector<32x128xf32> to vector<128xf32>
    %21 = vector.shape_cast %20 : vector<128xf32> to vector<1x128xf32>
    %c0_3 = arith.constant 0 : index
    %c0_4 = arith.constant 0 : index
    %22 = vector.load %arg3[%c0_3, %c0_4] : memref<1x128xf32, #tpu.memory_space<vmem>>, vector<1x128xf32>
    tpu.vector_store %arg3[%c0_3, %c0_4], %21 {strides = array<i32>} : memref<1x128xf32, #tpu.memory_space<vmem>>, vector<1x128xf32>,
    %23 = arith.mulf %19, %19 : vector<32x128xf32>
    %cst_5 = arith.constant 1.000000e+00 : f32
    %24 = vector.broadcast %cst_5 : f32 to vector<32x128xf32>
    %25 = arith.subf %24, %23 : vector<32x128xf32>
    %26 = vector.broadcast %5 : vector<32x1xf32> to vector<32x128xf32>
    %27 = arith.mulf %25, %26 : vector<32x128xf32>
    %cst_6 = arith.constant dense<0.000000e+00> : vector<128xf32>
    %28 = vector.multi_reduction <add>, %27, %cst_6 [0] : vector<32x128xf32> to vector<128xf32>
    %29 = vector.shape_cast %28 : vector<128xf32> to vector<1x128xf32>
    %cst_7 = arith.constant 0.000000e+00 : f32
    %30 = vector.broadcast %cst_7 : f32 to vector<1x128xf32>
    %31 = arith.subf %30, %29 : vector<1x128xf32>
    %32 = vector.broadcast %6 : vector<32x1xf32> to vector<32x128xf32>
    %33 = arith.mulf %25, %32 : vector<32x128xf32>
    %cst_8 = arith.constant dense<0.000000e+00> : vector<128xf32>
    %34 = vector.multi_reduction <add>, %33, %cst_8 [0] : vector<32x128xf32> to vector<128xf32>
    %35 = vector.shape_cast %34 : vector<128xf32> to vector<1x128xf32>
    %cst_9 = arith.constant 0.000000e+00 : f32
    %36 = vector.broadcast %cst_9 : f32 to vector<1x128xf32>
    %37 = arith.subf %36, %35 : vector<1x128xf32>
    %38 = vector.broadcast %7 : vector<32x1xf32> to vector<32x128xf32>
    %39 = arith.mulf %25, %38 : vector<32x128xf32>
    %cst_10 = arith.constant dense<0.000000e+00> : vector<128xf32>
    %40 = vector.multi_reduction <add>, %39, %cst_10 [0] : vector<32x128xf32> to vector<128xf32>
    %41 = vector.shape_cast %40 : vector<128xf32> to vector<1x128xf32>
    %cst_11 = arith.constant 0.000000e+00 : f32
    %42 = vector.broadcast %cst_11 : f32 to vector<1x128xf32>
    %43 = arith.subf %42, %41 : vector<1x128xf32>
    %44 = tpu.concatenate %31, %37, %43 in 0 : vector<1x128xf32>, vector<1x128xf32>, vector<1x128xf32> -> vector<3x128xf32>
    %c0_12 = arith.constant 0 : index
    %c0_13 = arith.constant 0 : index
    %45 = vector.load %arg4[%c0_12, %c0_13] : memref<3x128xf32, #tpu.memory_space<vmem>>, vector<3x128xf32>
    tpu.vector_store %arg4[%c0_12, %c0_13], %44 {strides = array<i32>} : memref<3x128xf32, #tpu.memory_space<vmem>>, vector<3x128xf32>,
    return
  }
  func.func @transform_0(%arg0: i32) -> (i32, i32) {
    %c0_i32 = arith.constant 0 : i32
    %c0_i32_0 = arith.constant 0 : i32
    return %c0_i32, %arg0 : i32, i32
  }
  func.func @transform_1(%arg0: i32) -> (i32, i32) {
    %c0_i32 = arith.constant 0 : i32
    %c0_i32_0 = arith.constant 0 : i32
    %c0_i32_1 = arith.constant 0 : i32
    return %c0_i32, %c0_i32_0 : i32, i32
  }
  func.func @transform_2(%arg0: i32) -> (i32, i32) {
    %c0_i32 = arith.constant 0 : i32
    %c0_i32_0 = arith.constant 0 : i32
    return %c0_i32, %arg0 : i32, i32
  }
  func.func @transform_3(%arg0: i32) -> (i32, i32) {
    %c0_i32 = arith.constant 0 : i32
    %c0_i32_0 = arith.constant 0 : i32
    return %c0_i32, %arg0 : i32, i32
  }
}

</mosaic_0001>

<llo_original>
// kernel: tpu_custom_call.1
$region0: #{tpu_custom_call.1}
  #allocation0 [shape = 'u32[]', space=smem, size = 0x4, offset = 0x4, fixed_abs, tag = 'smem constant byte address 0x4 - core index']
  #allocation1 [shape = 'u32[144,128]{1,0:T(1,128)}', space=vmem, size = 0x12000, scoped, tag = 'internal scratch']
  %s0 = inlined_call_operand.vmem [shape: f32[3,256], index: 0, kind: input, shape index: {}]
  %s1 = inlined_call_operand.vmem [shape: f32[32,3], index: 1, kind: input, shape index: {}]
  %s2 = inlined_call_operand.hbm [shape: f32[1,256], index: 2, kind: output, shape index: {0}]
  %s3 = inlined_call_operand.hbm [shape: f32[3,256], index: 3, kind: output, shape index: {1}]
  %4 = xla_tuple %s2, %s3
  %s5 = sld [smem:[#allocation0]]
  $region49: #{tpu_custom_call.1} parent=0
    _
  %s7 = ssub.s32 1, %s5
  %s8 = scalar_select 0, %s7, %s5
  $region1: #{tpu_custom_call.1} parent=0
    #allocation2 [shape = 'u8[1024]{0}', space=vmem, size = 0x400, scoped, tag = 'output window, operand 0']
    #allocation3 [shape = 's32[2]{0}', space=sflag, size = 0x8, scoped, tag = 'scoped memory for tpu_custom_call.1']
    #allocation4 [shape = 'u8[4096]{0}', space=vmem, size = 0x1000, scoped, tag = 'output window, operand 1']
    #allocation5 [shape = 's32[2]{0}', space=sflag, size = 0x8, scoped, tag = 'scoped memory for tpu_custom_call.1']
    %9 = vsyncpa [#allocation3], 0
    %s10 = scalar_lea.sflag [#allocation3], 1
    %11 = vsyncpa %s10, 0
    %12 = vsyncpa [#allocation5], 0
    %s13 = scalar_lea.sflag [#allocation5], 1
    %14 = vsyncpa %s13, 0
    loop: start=0, step=1, limit=4
    $region2: #{tpu_custom_call.1} parent=1 // loop_pre_header
      _
    $region3: #{tpu_custom_call.1} parent=1 // loop_header
      %s16 = sphi 0, %s20
      %p17 = scmp.ge.s32.totalorder %s16, 4
      %s26 = sphi 0, %s28
      %s29 = sphi 0, %s26
      %s30 = sphi 0, %s29
      %s46 = sphi 0, %s30
      %s50 = sphi 0, %s50
      %s52 = sphi 0, %s50
      %s53 = sphi 0, %s52
      %s67 = sphi 0, %s53
      %s73 = sphi 0, %s75
      %s76 = sphi 0, %s73
      %s77 = sphi 0, %s76
      %s93 = sphi 0, %s77
      %s99 = sphi 0, %s101
      %s102 = sphi 0, %s99
      %s103 = sphi 0, %s102
      %s119 = sphi 0, %s103
    $region4: #{tpu_custom_call.1} parent=1 // loop_header_branch
      %19 = sbr.rel (%p17) target = $region8
    $region5: #{tpu_custom_call.1} parent=1 // loop_body
      %s21 = ssub.s32 %s16, 1
      %s22 = ssub.s32 %s16, 2
      %s23 = sadd.s32 %s16, 1
      %s24 = ssub.s32 %s16, %s23
      %p25 = scmp.eq.s32.totalorder %s24, 0
      %s27 = sadd.s32 %s26, 1
      %s28 = scalar_select %p25, %s26, %s27
      %p31 = pneg %p25
      %p32 = scmp.eq.s32.totalorder %s16, 1
      %p33 = por %p31, %p32
      %p34 = scmp.ne.s32.totalorder %s26, %s29
      %p35 = scmp.eq.s32.totalorder %s16, 0
      %p36 = por %p34, %p35
      %p37 = scmp.ne.s32.totalorder %s26, %s29
      %p38 = scmp.eq.s32.totalorder %s21, 1
      %p39 = por %p37, %p38
      %p40 = scmp.ne.s32.totalorder %s29, %s30
      %p41 = scmp.eq.s32.totalorder %s21, 0
      %p42 = por %p40, %p41
      %p43 = scmp.ne.s32.totalorder %s29, %s30
      %p44 = scmp.eq.s32.totalorder %s22, 1
      %p45 = por %p43, %p44
      %p47 = scmp.ne.s32.totalorder %s30, %s46
      %p48 = scmp.eq.s32.totalorder %s22, 0
      %p49 = por %p47, %p48
      %s51 = sadd.s32 %s50, 1
      %p54 = scmp.eq.s32.totalorder %s16, 1
      %p55 = scmp.ne.s32.totalorder %s50, %s52
      %p56 = scmp.eq.s32.totalorder %s16, 0
      %p57 = por %p55, %p56
      %p58 = scmp.ne.s32.totalorder %s50, %s52
      %p59 = scmp.eq.s32.totalorder %s21, 1
      %p60 = por %p58, %p59
      %p61 = scmp.ne.s32.totalorder %s52, %s53
      %p62 = scmp.eq.s32.totalorder %s21, 0
      %p63 = por %p61, %p62
      %p64 = scmp.ne.s32.totalorder %s52, %s53
      %p65 = scmp.eq.s32.totalorder %s22, 1
      %p66 = por %p64, %p65
      %p68 = scmp.ne.s32.totalorder %s53, %s67
      %p69 = scmp.eq.s32.totalorder %s22, 0
      %p70 = por %p68, %p69
      %s71 = ssub.s32 %s16, %s23
      %p72 = scmp.eq.s32.totalorder %s71, 0
      %s74 = sadd.s32 %s73, 1
      %s75 = scalar_select %p72, %s73, %s74
      %p78 = pneg %p72
      %p79 = scmp.eq.s32.totalorder %s16, 1
      %p80 = por %p78, %p79
      %p81 = scmp.ne.s32.totalorder %s73, %s76
      %p82 = scmp.eq.s32.totalorder %s16, 0
      %p83 = por %p81, %p82
      %p84 = scmp.ne.s32.totalorder %s73, %s76
      %p85 = scmp.eq.s32.totalorder %s21, 1
      %p86 = por %p84, %p85
      %p87 = scmp.ne.s32.totalorder %s76, %s77
      %p88 = scmp.eq.s32.totalorder %s21, 0
      %p89 = por %p87, %p88
      %p90 = scmp.ne.s32.totalorder %s76, %s77
      %p91 = scmp.eq.s32.totalorder %s22, 1
      %p92 = por %p90, %p91
      %p94 = scmp.ne.s32.totalorder %s77, %s93
      %p95 = scmp.eq.s32.totalorder %s22, 0
      %p96 = por %p94, %p95
      %s97 = ssub.s32 %s16, %s23
      %p98 = scmp.eq.s32.totalorder %s97, 0
      %s100 = sadd.s32 %s99, 1
      %s101 = scalar_select %p98, %s99, %s100
      %p104 = pneg %p98
      %p105 = scmp.eq.s32.totalorder %s16, 1
      %p106 = por %p104, %p105
      %p107 = scmp.ne.s32.totalorder %s99, %s102
      %p108 = scmp.eq.s32.totalorder %s16, 0
      %p109 = por %p107, %p108
      %p110 = scmp.ne.s32.totalorder %s99, %s102
      %p111 = scmp.eq.s32.totalorder %s21, 1
      %p112 = por %p110, %p111
      %p113 = scmp.ne.s32.totalorder %s102, %s103
      %p114 = scmp.eq.s32.totalorder %s21, 0
      %p115 = por %p113, %p114
      %p116 = scmp.ne.s32.totalorder %s102, %s103
      %p117 = scmp.eq.s32.totalorder %s22, 1
      %p118 = por %p116, %p117
      %p120 = scmp.ne.s32.totalorder %s103, %s119
      %p121 = scmp.eq.s32.totalorder %s22, 0
      %p122 = por %p120, %p121
      %p123 = scmp.le.s32.totalorder 1, %s16
      %p124 = scmp.lt.s32.totalorder %s16, 3
      %p125 = pnand %p123, %p124
      %p126 = pneg %p125
      // Predicated region
      $region9: #{tpu_custom_call.1} parent=5 // pred_check
        _
      $region10: #{tpu_custom_call.1} parent=5 // pred_check_branch
        %128 = sbr.rel (%p125) target = $region12
      $region11: #{tpu_custom_call.1} parent=5 // pred_region
        %s129 = ssub.s32 %s16, 1
        // Predicated region
        $region13: #{tpu_custom_call.1} parent=11 // pred_check
          %p130 = pneg %p63
        $region14: #{tpu_custom_call.1} parent=11 // pred_check_branch
          %132 = sbr.rel (%p130) target = $region16
        $region15: #{tpu_custom_call.1} parent=11 // pred_region
          _
        $region16: #{tpu_custom_call.1} parent=11 // pred_fallthru
          _
      $region12: #{tpu_custom_call.1} parent=5 // pred_fallthru
        _
      %p133 = scmp.lt.s32.totalorder %s16, 2
      // Predicated region
      $region17: #{tpu_custom_call.1} parent=5 // pred_check
        %p134 = pneg %p133
      $region18: #{tpu_custom_call.1} parent=5 // pred_check_branch
        %136 = sbr.rel (%p134) target = $region20
      $region19: #{tpu_custom_call.1} parent=5 // pred_region
        // Predicated region
        $region21: #{tpu_custom_call.1} parent=19 // pred_check
          %p137 = pneg %p36
        $region22: #{tpu_custom_call.1} parent=19 // pred_check_branch
          %139 = sbr.rel (%p137) target = $region24
        $region23: #{tpu_custom_call.1} parent=19 // pred_region
          %p140 = scmp.lt.s32.totalorder %s16, 1
          %s141 = scalar_select %p140, %s16, 1
          %s142 = smul.addr %s141, 4
          %s143 = scalar_lea.vmem %s0, %s142
        $region24: #{tpu_custom_call.1} parent=19 // pred_fallthru
          _
      $region20: #{tpu_custom_call.1} parent=5 // pred_fallthru
        _
      %p144 = scmp.le.s32.totalorder 1, %s16
      %p145 = scmp.lt.s32.totalorder %s16, 3
      %p146 = pnand %p144, %p145
      %p147 = pneg %p146
      // Predicated region
      $region25: #{tpu_custom_call.1} parent=5 // pred_check
        _
      $region26: #{tpu_custom_call.1} parent=5 // pred_check_branch
        %149 = sbr.rel (%p146) target = $region28
      $region27: #{tpu_custom_call.1} parent=5 // pred_region
        %s150 = ssub.s32 %s16, 1
        %p151 = scmp.lt.s32.totalorder %s21, 1
        %s152 = scalar_select %p151, %s21, 1
        %s153 = smul.addr %s152, 4
        %s154 = scalar_lea.vmem %s0, %s153
        %p155 = pneg %p42
        %p156 = pneg %p39
        %p157 = pneg %p63
        %p158 = pneg %p60
        %p159 = pneg %p89
        %p160 = pneg %p86
        %s161 = sand.u32 %s76, 1
        %s162 = scalar_lea.sflag [#allocation3], %s161
        %s163 = sand.u32 %s76, 1
        %s164 = scalar_lea.vmem [#allocation2], %s163
        %p165 = pneg %p115
        %p166 = pneg %p112
        %s167 = sand.u32 %s102, 1
        %s168 = scalar_lea.sflag [#allocation5], %s167
        %s169 = sand.u32 %s102, 1
        %s170 = smul.addr %s169, 4
        %s171 = scalar_lea.vmem [#allocation4], %s170
        %p172 = scmp.lt.s32.totalorder %s21, 1
        %s173 = scalar_select %p172, %s21, 1
        %s174 = smul.addr %s173, 4
        %s175 = scalar_lea.vmem %s0, %s174
        %v176 = vld [vmem:[%s175] sm:$0x7]
        %v177 = vld [vmem:[%s1] sm:$0xff]
        %v178 = vld [vmem:[%s1 + $0x8] sm:$0xff]
        %v179 = vld [vmem:[%s1 + $0x10] sm:$0xff]
        %v180 = vld [vmem:[%s1 + $0x18] sm:$0xff]
        %182 = vset.pattern.permute.xlu0 0
        %183 = vperm.xlu0 %182, %v177
        %v184 = vpop.permute.xlu0 %183
        %187 = vset.pattern.permute.xlu0 0
        %188 = vperm.xlu0 %187, %v178
        %v189 = vpop.permute.xlu0 %188
        %192 = vset.pattern.permute.xlu0 0
        %193 = vperm.xlu0 %192, %v179
        %v194 = vpop.permute.xlu0 %193
        %197 = vset.pattern.permute.xlu0 0
        %198 = vperm.xlu0 %197, %v180
        %v199 = vpop.permute.xlu0 %198
        %v201 = vlaneseq
        %v202 = vshrl.u32 %v201, 7
        %v203 = vsub.s32 0, %v202
        %v204 = vrot.slane %v176, %v203
        %v205 = vmul.f32 %v184, %v204
        %v206 = vmul.f32 %v189, %v204
        %v207 = vmul.f32 %v194, %v204
        %v208 = vmul.f32 %v199, %v204
        %209 = vset.pattern.permute.xlu0 1
        %210 = vperm.xlu0 %209, %v177
        %v211 = vpop.permute.xlu0 %210
        %213 = vset.pattern.permute.xlu0 1
        %214 = vperm.xlu0 %213, %v178
        %v215 = vpop.permute.xlu0 %214
        %217 = vset.pattern.permute.xlu0 1
        %218 = vperm.xlu0 %217, %v179
        %v219 = vpop.permute.xlu0 %218
        %221 = vset.pattern.permute.xlu0 1
        %222 = vperm.xlu0 %221, %v180
        %v223 = vpop.permute.xlu0 %222
        %v225 = vlaneseq
        %v226 = vshrl.u32 %v225, 7
        %v227 = vsub.s32 1, %v226
        %v228 = vrot.slane %v176, %v227
        %v229 = vmul.f32 %v211, %v228
        %v230 = vmul.f32 %v215, %v228
        %v231 = vmul.f32 %v219, %v228
        %v232 = vmul.f32 %v223, %v228
        %v233 = vadd.f32 %v205, %v229
        %v234 = vadd.f32 %v206, %v230
        %v235 = vadd.f32 %v207, %v231
        %v236 = vadd.f32 %v208, %v232
        %237 = vset.pattern.permute.xlu0 2
        %238 = vperm.xlu0 %237, %v177
        %v239 = vpop.permute.xlu0 %238
        %241 = vset.pattern.permute.xlu0 2
        %242 = vperm.xlu0 %241, %v178
        %v243 = vpop.permute.xlu0 %242
        %245 = vset.pattern.permute.xlu0 2
        %246 = vperm.xlu0 %245, %v179
        %v247 = vpop.permute.xlu0 %246
        %249 = vset.pattern.permute.xlu0 2
        %250 = vperm.xlu0 %249, %v180
        %v251 = vpop.permute.xlu0 %250
        %v253 = vlaneseq
        %v254 = vshrl.u32 %v253, 7
        %v255 = vsub.s32 2, %v254
        %v256 = vrot.slane %v176, %v255
        %v257 = vmul.f32 %v239, %v256
        %v258 = vmul.f32 %v243, %v256
        %v259 = vmul.f32 %v247, %v256
        %v260 = vmul.f32 %v251, %v256
        %v261 = vadd.f32 %v233, %v257
        %v262 = vadd.f32 %v234, %v258
        %v263 = vadd.f32 %v235, %v259
        %v264 = vadd.f32 %v236, %v260
        %v265 = vtanh.pop %v261
        %v266 = vtanh.pop %v262
        %v267 = vtanh.pop %v263
        %v268 = vtanh.pop %v264
        %v269 = vadd.f32 %v265, %v266
        %v270 = vadd.f32 %v269, %v267
        %v271 = vadd.f32 %v270, %v268
        %v272 = vrot.slane %v271, 4
        %v273 = vadd.f32 %v271, %v272
        %v274 = vrot.slane %v273, 2
        %v275 = vadd.f32 %v273, %v274
        %v276 = vrot.slane %v275, 1
        %v277 = vadd.f32 %v275, %v276
        %278 = vst [vmem:[%s164] sm:$0x1] %v277
        %v279 = vmul.f32 %v265, %v265
        %v280 = vmul.f32 %v266, %v266
        %v281 = vmul.f32 %v267, %v267
        %v282 = vmul.f32 %v268, %v268
        %v283 = vsub.f32 1.0, %v279
        %v284 = vsub.f32 1.0, %v280
        %v285 = vsub.f32 1.0, %v281
        %v286 = vsub.f32 1.0, %v282
        %v287 = vmul.f32 %v283, %v184
        %v288 = vmul.f32 %v284, %v189
        %v289 = vmul.f32 %v285, %v194
        %v290 = vmul.f32 %v286, %v199
        %v291 = vadd.f32 %v287, %v288
        %v292 = vadd.f32 %v291, %v289
        %v293 = vadd.f32 %v292, %v290
        %v294 = vrot.slane %v293, 4
        %v295 = vadd.f32 %v293, %v294
        %v296 = vrot.slane %v295, 2
        %v297 = vadd.f32 %v295, %v296
        %v298 = vrot.slane %v297, 1
        %v299 = vadd.f32 %v297, %v298
        %v300 = vsub.f32 0.0, %v299
        %v301 = vmul.f32 %v283, %v211
        %v302 = vmul.f32 %v284, %v215
        %v303 = vmul.f32 %v285, %v219
        %v304 = vmul.f32 %v286, %v223
        %v305 = vadd.f32 %v301, %v302
        %v306 = vadd.f32 %v305, %v303
        %v307 = vadd.f32 %v306, %v304
        %v308 = vrot.slane %v307, 4
        %v309 = vadd.f32 %v307, %v308
        %v310 = vrot.slane %v309, 2
        %v311 = vadd.f32 %v309, %v310
        %v312 = vrot.slane %v311, 1
        %v313 = vadd.f32 %v311, %v312
        %v314 = vsub.f32 0.0, %v313
        %v315 = vmul.f32 %v283, %v239
        %v316 = vmul.f32 %v284, %v243
        %v317 = vmul.f32 %v285, %v247
        %v318 = vmul.f32 %v286, %v251
        %v319 = vadd.f32 %v315, %v316
        %v320 = vadd.f32 %v319, %v317
        %v321 = vadd.f32 %v320, %v318
        %v322 = vrot.slane %v321, 4
        %v323 = vadd.f32 %v321, %v322
        %v324 = vrot.slane %v323, 2
        %v325 = vadd.f32 %v323, %v324
        %v326 = vrot.slane %v325, 1
        %v327 = vadd.f32 %v325, %v326
        %v328 = vsub.f32 0.0, %v327
        %vm329 = vcmask 1040384
        %v330 = vsel %vm329, %v300, %v314
        %vm331 = vcmask 1041408
        %v332 = vsel %vm331, %v330, %v328
        %333 = vst [vmem:[%s171] sm:$0x7] %v332
        %s334 = sand.u32 %s76, 1
        %s335 = scalar_lea.sflag [#allocation3], %s334
        %s336 = sand.u32 %s76, 1
        %s337 = scalar_lea.vmem [#allocation2], %s336
        %s338 = sand.u32 %s102, 1
        %s339 = scalar_lea.sflag [#allocation5], %s338
        %s340 = sand.u32 %s102, 1
        %s341 = smul.addr %s340, 4
        %s342 = scalar_lea.vmem [#allocation4], %s341
        // Predicated region
        $region29: #{tpu_custom_call.1} parent=27 // pred_check
          %p343 = pneg %p86
        $region30: #{tpu_custom_call.1} parent=27 // pred_check_branch
          %345 = sbr.rel (%p343) target = $region32
        $region31: #{tpu_custom_call.1} parent=27 // pred_region
          %s347 = ssub.s32 16, 16
          %348 = vsyncadd %s335, %s347
          %s349 = smul.addr %s21, 16
          %s350 = scalar_lea.hbm %s2, %s349
          %s352 = sshll.u32 %s337, 4
          %s353 = int_to_ptr.vmem [resolvable:$true] %s352
          %355 = dma.vmem_to_hbm [thread:$0]  %s353, 16, %s350, %s335
        $region32: #{tpu_custom_call.1} parent=27 // pred_fallthru
          _
        // Predicated region
        $region33: #{tpu_custom_call.1} parent=27 // pred_check
          %p356 = pneg %p112
        $region34: #{tpu_custom_call.1} parent=27 // pred_check_branch
          %358 = sbr.rel (%p356) target = $region36
        $region35: #{tpu_custom_call.1} parent=27 // pred_region
          %s360 = ssub.s32 64, 64
          %361 = vsyncadd %s339, %s360
          %s362 = smul.addr %s21, 64
          %s363 = scalar_lea.hbm %s3, %s362
          %s365 = sshll.u32 %s342, 4
          %s366 = int_to_ptr.vmem [resolvable:$true] %s365
          %368 = dma.vmem_to_hbm [thread:$0]  %s366, 64, %s363, %s339
        $region36: #{tpu_custom_call.1} parent=27 // pred_fallthru
          _
      $region28: #{tpu_custom_call.1} parent=5 // pred_fallthru
        _
      %p369 = scmp.le.s32.totalorder 2, %s16
      // Predicated region
      $region37: #{tpu_custom_call.1} parent=5 // pred_check
        %p370 = pneg %p369
      $region38: #{tpu_custom_call.1} parent=5 // pred_check_branch
        %372 = sbr.rel (%p370) target = $region40
      $region39: #{tpu_custom_call.1} parent=5 // pred_region
        %s373 = ssub.s32 %s16, 2
        // Predicated region
        $region41: #{tpu_custom_call.1} parent=39 // pred_check
          %p374 = pneg %p92
        $region42: #{tpu_custom_call.1} parent=39 // pred_check_branch
          %376 = sbr.rel (%p374) target = $region44
        $region43: #{tpu_custom_call.1} parent=39 // pred_region
          %s377 = sand.u32 %s77, 1
          %s378 = scalar_lea.sflag [#allocation3], %s377
          %s379 = sand.u32 %s77, 1
          %s380 = scalar_lea.vmem [#allocation2], %s379
          %381 = dma.done %s378, 16
        $region44: #{tpu_custom_call.1} parent=39 // pred_fallthru
          _
        // Predicated region
        $region45: #{tpu_custom_call.1} parent=39 // pred_check
          %p382 = pneg %p118
        $region46: #{tpu_custom_call.1} parent=39 // pred_check_branch
          %384 = sbr.rel (%p382) target = $region48
        $region47: #{tpu_custom_call.1} parent=39 // pred_region
          %s385 = sand.u32 %s103, 1
          %s386 = scalar_lea.sflag [#allocation5], %s385
          %s387 = sand.u32 %s103, 1
          %s388 = smul.addr %s387, 4
          %s389 = scalar_lea.vmem [#allocation4], %s388
          %390 = dma.done %s386, 64
        $region48: #{tpu_custom_call.1} parent=39 // pred_fallthru
          _
      $region40: #{tpu_custom_call.1} parent=5 // pred_fallthru
        _
    $region6: #{tpu_custom_call.1} parent=1 // loop_footer
      %s20 = sadd.s32 1, %s16
    $region7: #{tpu_custom_call.1} parent=1 // loop_footer_branch
      %15 = sbr.rel target = $region3
    $region8: #{tpu_custom_call.1} parent=1 // loop_exit
      _
    %391 = vsyncpa [#allocation3], 1
    %s392 = scalar_lea.sflag [#allocation3], 1
    %393 = vsyncpa %s392, 1
    %394 = vsyncpa [#allocation5], 1
    %s395 = scalar_lea.sflag [#allocation5], 1
    %396 = vsyncpa %s395, 1

</llo_original>
